<compile_context>
chip_gen: v7x
topology: tpu7x:2x2x1
jax: 0.10.0
libtpu: 0.0.40
codegen_flags: <defaults>
</compile_context>

<pallas_src>
import jax
import jax.numpy as jnp
from jax.experimental import pallas as pl
from jax.experimental.pallas import tpu as pltpu

C = 0.3                        # compression constant from FE.__init__
_POW = (1.0 - C) / 2.0         # mag^(1-c) == (re^2 + im^2 + eps)^((1-c)/2)
_LANE = 128                    # TPU lane width
_SUB = 8                       # f32 sublanes per vreg
_MAX_BLOCK_BYTES = 4 * 1024 * 1024     # per-buffer block cap (in+out double-buffered)
_LANE_CAP = 16384              # max lanes per block (keeps per-row DMA chunks sane)


def fe_kernel(x_ref, o_ref):
    """x_ref, o_ref: (Rt, Ft) f32 blocks; rows alternate re/im (row r pairs with r^1)."""
    x = x_ref[...]                                  # (Rt, Ft) dense slab
    sq = x * x
    rt = x.shape[0]                                 # static, even by construction
    prev = pltpu.roll(sq, shift=1, axis=0)          # prev[r] = sq[r-1]
    nxt = pltpu.roll(sq, shift=rt - 1, axis=0)      # nxt[r]  = sq[r+1]  (roll by -1)
    row = jax.lax.broadcasted_iota(jnp.int32, x.shape, 0)
    partner = jnp.where((row & 1) == 0, nxt, prev)  # sq of the other component
    msq = sq + partner + 1e-12                      # |x|^2 + eps
    # mag^-(1-c) = msq^-((1-c)/2): one log + one exp on the EUP, then one VPU mul.
    scale = jnp.exp(-_POW * jnp.log(msq))
    o_ref[...] = x * scale


def _pick_tile(full, unit, cap):
    """Largest multiple of `unit` <= cap that divides `full`; else the full extent.

    Tiles always divide exactly (no boundary masking needed), and full-extent
    blocks are always legal regardless of (8,128) alignment.
    """
    if full % unit != 0 or full <= cap:
        return full
    t = (cap // unit) * unit
    while t >= unit:
        if full % t == 0:
            return t
        t -= unit
    return full


def fe_forward(x, *, max_block_bytes=_MAX_BLOCK_BYTES, lane_cap=_LANE_CAP):
    """x: (B, F, 1, 2) float32 -> (B, 2, 1, F) float32 (matches PyTorch FE)."""
    B, F, one, two = x.shape
    assert one == 1 and two == 2
    rows = 2 * B

    # The module's permute(0,3,2,1).contiguous(); the only extra HBM pass left.
    # The surrounding reshapes are free (contiguous views).
    # TODO(synk): fuse this transpose into the producer/consumer when FE is part
    # of a larger hand-written kernel; standalone, one transpose is inherent.
    x2 = jnp.transpose(x.reshape(B, F, 2), (0, 2, 1)).reshape(rows, F)

    # Lane-dense F tiling (multiples of 128) and 8-aligned row tiling; both fall
    # back to the full extent when ragged, so blocks always cover exactly.
    ft = _pick_tile(F, _LANE, max(_LANE, lane_cap))
    row_budget = max(_SUB, (max_block_bytes // (ft * 4)) // _SUB * _SUB)
    rt = _pick_tile(rows, _SUB, row_budget)         # even (rows=2B is even, 8|rt otherwise)

    grid = (rows // rt, F // ft)
    out2 = pl.pallas_call(
        fe_kernel,
        out_shape=jax.ShapeDtypeStruct((rows, F), x.dtype),
        grid=grid,
        in_specs=[pl.BlockSpec((rt, ft), lambda i, j: (i, j))],
        out_specs=pl.BlockSpec((rt, ft), lambda i, j: (i, j)),
        compiler_params=pltpu.CompilerParams(
            dimension_semantics=("parallel", "parallel"),
            vmem_limit_bytes=32 * 1024 * 1024),
    )(x2)

    return out2.reshape(B, 2, 1, F)                 # free reshape


def fe_reference(x):
    """Pure-JAX reference mirroring the PyTorch code."""
    x_mag = jnp.sqrt(x[..., 0:1] ** 2 + x[..., 1:2] ** 2 + 1e-12)  # (B,F,1,1)
    x_c = x / (jnp.power(x_mag, 1.0 - C) + 1e-12)                  # (B,F,1,2)
    return jnp.transpose(x_c, (0, 3, 2, 1))                        # (B,2,1,F)


if __name__ == "__main__":
    key = jax.random.PRNGKey(0)

    # Shipped shape: B=2, F=161 (F not a multiple of 128) -> single full-array block.
    B, F = 2, 161
    x = jax.random.normal(key, (B, F, 1, 2), dtype=jnp.float32)
    out = jax.block_until_ready(fe_forward(x))
    ref = fe_reference(x)
    assert out.shape == (B, 2, 1, F), out.shape
    assert jnp.allclose(out, ref, atol=1e-5, rtol=1e-5), float(
        jnp.max(jnp.abs(out - ref)))

    # Tiled path: small caps force a (2, 4) parallel grid (exercises row/F tiling
    # and the cross-block re/im pairing).
    B2, F2 = 8, 512
    x_big = jax.random.normal(jax.random.PRNGKey(1), (B2, F2, 1, 2), dtype=jnp.float32)
    out_big = jax.block_until_ready(
        fe_forward(x_big, max_block_bytes=4096, lane_cap=128))
    ref_big = fe_reference(x_big)
    assert out_big.shape == (B2, 2, 1, F2), out_big.shape
    assert jnp.allclose(out_big, ref_big, atol=1e-5, rtol=1e-5), float(
        jnp.max(jnp.abs(out_big - ref_big)))

    print("KERNEL_OK")
</pallas_src>

<mosaic_0001>
module attributes {stable_mosaic.version = 11 : i64} {
  func.func @fe_kernel(%arg0: i32, %arg1: i32, %arg2: memref<4x161xf32, #tpu.memory_space<vmem>>, %arg3: memref<4x161xf32, #tpu.memory_space<vmem>>) attributes {dimension_semantics = [#tpu.dimension_semantics<parallel>, #tpu.dimension_semantics<parallel>], iteration_bounds = array<i64: 1, 1>, scalar_prefetch = 0 : i64, scratch_operands = 0 : i64, tpu.core_type = #tpu.core_type<tc>, window_params = [{transform_indices = @transform_0, window_bounds = array<i64: 4, 161>}, {transform_indices = @transform_1, window_bounds = array<i64: 4, 161>}]} {
    %c0 = arith.constant 0 : index
    %c0_0 = arith.constant 0 : index
    %0 = vector.load %arg2[%c0, %c0_0] : memref<4x161xf32, #tpu.memory_space<vmem>>, vector<4x161xf32>
    %1 = arith.mulf %0, %0 : vector<4x161xf32>
    %c1_i32 = arith.constant 1 : i32
    %2 = tpu.dynamic_rotate %1 by %c1_i32 dim 0 : vector<4x161xf32>, i32 -> vector<4x161xf32>
    %c3_i32 = arith.constant 3 : i32
    %3 = tpu.dynamic_rotate %1 by %c3_i32 dim 0 : vector<4x161xf32>, i32 -> vector<4x161xf32>
    %4 = tpu.iota {dimensions = array<i32: 0>} : vector<4x161xi32>
    %c1_i32_1 = arith.constant 1 : i32
    %5 = vector.broadcast %c1_i32_1 : i32 to vector<4x161xi32>
    %6 = arith.andi %4, %5 : vector<4x161xi32>
    %c0_i32 = arith.constant 0 : i32
    %7 = vector.broadcast %c0_i32 : i32 to vector<4x161xi32>
    %8 = arith.cmpi eq, %6, %7 : vector<4x161xi32>
    %9 = arith.select %8, %3, %2 : vector<4x161xi1>, vector<4x161xf32>
    %10 = arith.addf %1, %9 : vector<4x161xf32>
    %cst = arith.constant 9.99999996E-13 : f32
    %11 = vector.broadcast %cst : f32 to vector<4x161xf32>
    %12 = arith.addf %10, %11 : vector<4x161xf32>
    %13 = math.log %12 : vector<4x161xf32>
    %cst_2 = arith.constant -3.500000e-01 : f32
    %14 = vector.broadcast %cst_2 : f32 to vector<4x161xf32>
    %15 = arith.mulf %14, %13 : vector<4x161xf32>
    %16 = math.exp %15 : vector<4x161xf32>
    %17 = arith.mulf %0, %16 : vector<4x161xf32>
    %c0_3 = arith.constant 0 : index
    %c0_4 = arith.constant 0 : index
    %18 = vector.load %arg3[%c0_3, %c0_4] : memref<4x161xf32, #tpu.memory_space<vmem>>, vector<4x161xf32>
    tpu.vector_store %arg3[%c0_3, %c0_4], %17 {strides = array<i32>} : memref<4x161xf32, #tpu.memory_space<vmem>>, vector<4x161xf32>,
    return
  }
  func.func @transform_0(%arg0: i32, %arg1: i32) -> (i32, i32) {
    %c0_i32 = arith.constant 0 : i32
    return %arg0, %arg1 : i32, i32
  }
  func.func @transform_1(%arg0: i32, %arg1: i32) -> (i32, i32) {
    %c0_i32 = arith.constant 0 : i32
    return %arg0, %arg1 : i32, i32
  }
}

</mosaic_0001>

<llo_original>
// kernel: tpu_custom_call.1
$region0: #{tpu_custom_call.1}
  #allocation0 [shape = 'u32[]', space=smem, size = 0x4, offset = 0x4, fixed_abs, tag = 'smem constant byte address 0x4 - core index']
  #allocation1 [shape = 'u32[144,128]{1,0:T(1,128)}', space=vmem, size = 0x12000, scoped, tag = 'internal scratch']
  %s0 = inlined_call_operand.hbm [shape: f32[4,161], index: 0, kind: input, shape index: {}]
  %s1 = inlined_call_operand.hbm [shape: f32[4,161], index: 1, kind: output, shape index: {}]
  %s2 = sld [smem:[#allocation0]]
  $region18: #{tpu_custom_call.1} parent=0
    _
  %s4 = ssub.s32 1, %s2
  %s5 = scalar_select 0, %s4, %s2
  $region1: #{tpu_custom_call.1} parent=0
    #allocation2 [shape = 'u8[4096]{0}', space=vmem, size = 0x1000, scoped, tag = 'input window, operand 0, single buffered']
    #allocation3 [shape = 's32[1]{0}', space=sflag, size = 0x4, scoped, tag = 'scoped memory for tpu_custom_call.1']
    #allocation4 [shape = 's32[1]{0}', space=sflag, size = 0x4, scoped, tag = 'scoped memory for tpu_custom_call.1']
    #allocation5 [shape = 'u8[4096]{0}', space=vmem, size = 0x1000, scoped, tag = 'output window, operand 0, single buffered']
    %6 = vsyncpa [#allocation3], 0
    %7 = vsyncpa [#allocation4], 0
    // Predicated region
    $region2: #{tpu_custom_call.1} parent=1 // pred_check
      _
    $region3: #{tpu_custom_call.1} parent=1 // pred_check_branch
      %9 = sbr.rel (0) target = $region5
    $region4: #{tpu_custom_call.1} parent=1 // pred_region
      %s11 = ssub.s32 128, 128
      %12 = vsyncadd [#allocation3], %s11
      %s14 = sshll.u32 [#allocation2], 4
      %s15 = int_to_ptr.vmem [resolvable:$true] %s14
      %17 = dma.hbm_to_vmem [thread:$0]  %s0, 128, %s15, [#allocation3]
    $region5: #{tpu_custom_call.1} parent=1 // pred_fallthru
      _
    // Predicated region
    $region6: #{tpu_custom_call.1} parent=1 // pred_check
      _
    $region7: #{tpu_custom_call.1} parent=1 // pred_check_branch
      %19 = sbr.rel (0) target = $region9
    $region8: #{tpu_custom_call.1} parent=1 // pred_region
      %20 = dma.done [#allocation3], 128
    $region9: #{tpu_custom_call.1} parent=1 // pred_fallthru
      _
    %v21 = vld [vmem:[#allocation2] sm:$0xff]
    %v22 = vmul.f32 %v21, %v21
    %v24 = vcombine.high %v22, %v22
    %vm26 = vcmask 1047556
    %v27 = vrot.slane %v22, 4
    %v28 = vsel %vm26, %v27, %v22
    %v29 = vrot.slane %v24, 4
    %v30 = vsel %vm26, %v29, %v24
    %v31 = vrot.slane %v28, 4
    %v32 = vrot.slane %v30, 4
    %v33 = vsel %vm26, %v31, %v22
    %v34 = vsel %vm26, %v32, %v24
    %v35 = vlaneseq
    %v36 = vshrl.u32 %v35, 7
    %v37 = vand.u32 %v36, 1
    %vm38 = vcmp.eq.s32.totalorder %v37, 0
    %v41 = vrot.slane %v33, 1
    %v42 = vrot.slane %v34, 1
    %v45 = vrot.slane %v33, 3
    %v46 = vrot.slane %v34, 3
    %v49 = vsel %vm38, %v41, %v45
    %v50 = vsel %vm38, %v42, %v46
    %v53 = vcombine.low %v49, %v50
    %v55 = vadd.f32 %v22, %v53
    %v56 = vadd.f32 %v55, 1e-12
    %v57 = vlog2.pop %v56
    %v58 = vmul.f32 %v57, 0.6931472
    %v59 = vmul.f32 %v58, -0.35
    %v60 = vmul.f32 %v59, 1.442695
    %v61 = vpow.pop %v60
    %v62 = vmul.f32 %v21, %v61
    %vm63 = vcmask 1043456
    %vm64 = vcmask 269316
    %vm65 = vmor %vm64, %vm63
    %66 = vst.msk [vmem:[#allocation5] sm:$0xff] %vm65, %v62
    // Predicated region
    $region10: #{tpu_custom_call.1} parent=1 // pred_check
      _
    $region11: #{tpu_custom_call.1} parent=1 // pred_check_branch
      %68 = sbr.rel (0) target = $region13
    $region12: #{tpu_custom_call.1} parent=1 // pred_region
      %s70 = ssub.s32 128, 128
      %71 = vsyncadd [#allocation4], %s70
      %s73 = sshll.u32 [#allocation5], 4
      %s74 = int_to_ptr.vmem [resolvable:$true] %s73
      %76 = dma.vmem_to_hbm [thread:$0]  %s74, 128, %s1, [#allocation4]
    $region13: #{tpu_custom_call.1} parent=1 // pred_fallthru
      _
    // Predicated region
    $region14: #{tpu_custom_call.1} parent=1 // pred_check
      _
    $region15: #{tpu_custom_call.1} parent=1 // pred_check_branch
      %78 = sbr.rel (0) target = $region17
    $region16: #{tpu_custom_call.1} parent=1 // pred_region
      %79 = dma.done [#allocation4], 128
    $region17: #{tpu_custom_call.1} parent=1 // pred_fallthru
      _
    %80 = vsyncpa [#allocation3], 1
    %81 = vsyncpa [#allocation4], 1

</llo_original>
